<compile_context>
chip_gen: v5e
topology: v5e:2x2
jax: 0.10.0
libtpu: 0.0.40
codegen_flags: <defaults>
</compile_context>

<pallas_src>
import functools

import jax
import jax.numpy as jnp
from jax import lax
from jax.experimental import pallas as pl
from jax.experimental.pallas import tpu as pltpu

BN_EPS = 1e-5
LANE = 128
SUBLANE = 8


def _round_up(n, m):
    return ((n + m - 1) // m) * m


def _bn_relu(y, gamma, beta):
    """BatchNorm1d with batch statistics (biased var) followed by ReLU.

    Padded feature columns of `y` are identically zero, so mean=0, var=0,
    y_hat=0 and (with gamma=beta=0 in the padding) the output stays 0 there.
    """
    mean = jnp.mean(y, axis=0, keepdims=True)
    centered = y - mean
    var = jnp.mean(centered * centered, axis=0, keepdims=True)
    y_hat = centered * lax.rsqrt(var + BN_EPS)
    return jnp.maximum(y_hat * gamma + beta, 0.0)


def _make_mlp_kernel(num_layers, batch, users_pad, items_pad):
    """Builds the fused kernel: gather -> [Linear -> BN -> ReLU] * num_layers."""

    def kernel(u_ref, i_ref, eu_ref, ei_ref, *refs):
        o_ref = refs[-1]
        params = refs[:-1]

        # --- Embedding gather as an exact one-hot selection matmul (MXU). ---
        u_oh = (lax.broadcasted_iota(jnp.int32, (batch, users_pad), 1)
                == u_ref[...]).astype(jnp.float32)
        i_oh = (lax.broadcasted_iota(jnp.int32, (batch, items_pad), 1)
                == i_ref[...]).astype(jnp.float32)
        ue = jnp.dot(u_oh, eu_ref[...], preferred_element_type=jnp.float32)
        ie = jnp.dot(i_oh, ei_ref[...], preferred_element_type=jnp.float32)

        # --- Layer 0: split weight (user/item halves) => no concat copy. ---
        w0u, w0i, b0, g0, be0 = params[0:5]
        y = (jnp.dot(ue, w0u[...], preferred_element_type=jnp.float32)
             + jnp.dot(ie, w0i[...], preferred_element_type=jnp.float32)
             + b0[...])
        x = _bn_relu(y, g0[...], be0[...])

        # --- Remaining layers, all lane-dense (B, F_PAD) in registers. ---
        p = 5
        for _ in range(1, num_layers):
            w, b, g, be = params[p:p + 4]
            p += 4
            y = jnp.dot(x, w[...], preferred_element_type=jnp.float32) + b[...]
            x = _bn_relu(y, g[...], be[...])

        o_ref[...] = x.astype(o_ref.dtype)

    return kernel


@functools.partial(jax.jit, static_argnames=("f_pad", "out_dim"))
def mlp_forward(user_idx, item_idx, emb_user_p, emb_item_p, padded_params,
                f_pad, out_dim):
    """Single gridless pallas_call for the full forward pass + final slice."""
    B = user_idx.shape[0]
    num_layers = 1 + (len(padded_params) - 5) // 4
    vmem = pl.BlockSpec(memory_space=pltpu.MemorySpace.VMEM)
    kernel = _make_mlp_kernel(num_layers, B,
                              emb_user_p.shape[0], emb_item_p.shape[0])
    n_in = 4 + len(padded_params)
    out = pl.pallas_call(
        kernel,
        out_shape=jax.ShapeDtypeStruct((B, f_pad), jnp.float32),
        in_specs=[vmem] * n_in,
        out_specs=vmem,
    )(user_idx.reshape(B, 1).astype(jnp.int32),
      item_idx.reshape(B, 1).astype(jnp.int32),
      emb_user_p, emb_item_p, *padded_params)
    return out[:, :out_dim]


class MLP:
    """JAX/Pallas port of the PyTorch MLP recommender module."""

    def __init__(self, config, key):
        self.emb_dim = config["emb_dim"]
        self.nb_users = config["user_cnts"]
        self.nb_items = config["item_cnts"]
        self.hidden_dims = config["hidden_dims"]
        # Common lane-dense padded feature width for all layers.
        self.f_pad = max(LANE, _round_up(max(self.hidden_dims), LANE))

        keys = jax.random.split(key, 2 + 2 * len(self.hidden_dims))
        # nn.Embedding default init: N(0, 1).  Pad vocab to sublane multiple;
        # padded rows are zero and are never selected by valid indices.
        users_pad = _round_up(self.nb_users, SUBLANE)
        items_pad = _round_up(self.nb_items, SUBLANE)
        eu = jax.random.normal(keys[0], (self.nb_users, self.emb_dim),
                               dtype=jnp.float32)
        ei = jax.random.normal(keys[1], (self.nb_items, self.emb_dim),
                               dtype=jnp.float32)
        self.emb_user = (jnp.zeros((users_pad, self.emb_dim), jnp.float32)
                         .at[:self.nb_users].set(eu))
        self.emb_item = (jnp.zeros((items_pad, self.emb_dim), jnp.float32)
                         .at[:self.nb_items].set(ei))

        # Pre-pad / pre-shape all layer params once (hoisted out of forward).
        params = []
        in_dim = 2 * self.emb_dim
        for li, out_dim in enumerate(self.hidden_dims):
            kw, kb = keys[2 + 2 * li], keys[3 + 2 * li]
            bound = 1.0 / (in_dim ** 0.5)  # nn.Linear default uniform init
            w = jax.random.uniform(kw, (in_dim, out_dim), jnp.float32,
                                   minval=-bound, maxval=bound)
            b = jax.random.uniform(kb, (out_dim,), jnp.float32,
                                   minval=-bound, maxval=bound)
            gamma = jnp.ones((out_dim,), jnp.float32)   # BatchNorm1d weight
            beta = jnp.zeros((out_dim,), jnp.float32)   # BatchNorm1d bias

            b_p = jnp.zeros((1, self.f_pad), jnp.float32).at[0, :out_dim].set(b)
            g_p = jnp.zeros((1, self.f_pad), jnp.float32).at[0, :out_dim].set(gamma)
            be_p = jnp.zeros((1, self.f_pad), jnp.float32).at[0, :out_dim].set(beta)

            if li == 0:
                # Split W0 into user / item halves so the kernel never concats.
                w_u = (jnp.zeros((self.emb_dim, self.f_pad), jnp.float32)
                       .at[:, :out_dim].set(w[:self.emb_dim]))
                w_i = (jnp.zeros((self.emb_dim, self.f_pad), jnp.float32)
                       .at[:, :out_dim].set(w[self.emb_dim:]))
                params += [w_u, w_i, b_p, g_p, be_p]
            else:
                w_p = (jnp.zeros((self.f_pad, self.f_pad), jnp.float32)
                       .at[:in_dim, :out_dim].set(w))
                params += [w_p, b_p, g_p, be_p]
            in_dim = out_dim
        self.params = tuple(params)

    def __call__(self, user_idx, item_idx):
        return mlp_forward(user_idx, item_idx, self.emb_user, self.emb_item,
                           self.params, self.f_pad, self.hidden_dims[-1])


if __name__ == "__main__":
    config = {
        "emb_dim": 16,
        "user_cnts": 50,
        "item_cnts": 40,
        "hidden_dims": [32, 16, 8],
    }
    key = jax.random.PRNGKey(0)
    model_key, u_key, i_key = jax.random.split(key, 3)

    model = MLP(config, model_key)

    B = 8
    user_idx = jax.random.randint(u_key, (B,), 0, config["user_cnts"])
    item_idx = jax.random.randint(i_key, (B,), 0, config["item_cnts"])

    out = model(user_idx, item_idx)
    out = jax.block_until_ready(out)
    assert out.shape == (B, config["hidden_dims"][-1]), out.shape
    assert bool(jnp.all(jnp.isfinite(out)))
    assert bool(jnp.all(out >= 0.0))  # ReLU output
    print("KERNEL_OK")
</pallas_src>

<mosaic_0001>
module attributes {stable_mosaic.version = 11 : i64} {
  func.func @kernel(%arg0: memref<8x1xi32, #tpu.memory_space<vmem>>, %arg1: memref<8x1xi32, #tpu.memory_space<vmem>>, %arg2: memref<56x16xf32, #tpu.memory_space<vmem>>, %arg3: memref<40x16xf32, #tpu.memory_space<vmem>>, %arg4: memref<16x128xf32, #tpu.memory_space<vmem>>, %arg5: memref<16x128xf32, #tpu.memory_space<vmem>>, %arg6: memref<1x128xf32, #tpu.memory_space<vmem>>, %arg7: memref<1x128xf32, #tpu.memory_space<vmem>>, %arg8: memref<1x128xf32, #tpu.memory_space<vmem>>, %arg9: memref<128x128xf32, #tpu.memory_space<vmem>>, %arg10: memref<1x128xf32, #tpu.memory_space<vmem>>, %arg11: memref<1x128xf32, #tpu.memory_space<vmem>>, %arg12: memref<1x128xf32, #tpu.memory_space<vmem>>, %arg13: memref<128x128xf32, #tpu.memory_space<vmem>>, %arg14: memref<1x128xf32, #tpu.memory_space<vmem>>, %arg15: memref<1x128xf32, #tpu.memory_space<vmem>>, %arg16: memref<1x128xf32, #tpu.memory_space<vmem>>, %arg17: memref<8x128xf32, #tpu.memory_space<vmem>>) attributes {dimension_semantics = [], scalar_prefetch = 0 : i64, scratch_operands = 0 : i64, tpu.core_type = #tpu.core_type<tc>} {
    %0 = tpu.iota {dimensions = array<i32: 1>} : vector<8x56xi32>
    %c0 = arith.constant 0 : index
    %c0_0 = arith.constant 0 : index
    %1 = vector.load %arg0[%c0, %c0_0] : memref<8x1xi32, #tpu.memory_space<vmem>>, vector<8x1xi32>
    %2 = vector.broadcast %1 : vector<8x1xi32> to vector<8x56xi32>
    %3 = arith.cmpi eq, %0, %2 : vector<8x56xi32>
    %4 = arith.extui %3 : vector<8x56xi1> to vector<8x56xi32>
    %5 = arith.sitofp %4 : vector<8x56xi32> to vector<8x56xf32>
    %6 = tpu.iota {dimensions = array<i32: 1>} : vector<8x40xi32>
    %c0_1 = arith.constant 0 : index
    %c0_2 = arith.constant 0 : index
    %7 = vector.load %arg1[%c0_1, %c0_2] : memref<8x1xi32, #tpu.memory_space<vmem>>, vector<8x1xi32>
    %8 = vector.broadcast %7 : vector<8x1xi32> to vector<8x40xi32>
    %9 = arith.cmpi eq, %6, %8 : vector<8x40xi32>
    %10 = arith.extui %9 : vector<8x40xi1> to vector<8x40xi32>
    %11 = arith.sitofp %10 : vector<8x40xi32> to vector<8x40xf32>
    %c0_3 = arith.constant 0 : index
    %c0_4 = arith.constant 0 : index
    %12 = vector.load %arg2[%c0_3, %c0_4] : memref<56x16xf32, #tpu.memory_space<vmem>>, vector<56x16xf32>
    %cst = arith.constant dense<0.000000e+00> : vector<8x16xf32>
    %13 = tpu.matmul %5, %12, %cst {dimension_numbers = #tpu.dot_dimension_numbers<[1], [0], [0], [1], [0, 0, 1, 1], [], []>} : vector<8x56xf32>, vector<56x16xf32>, vector<8x16xf32> -> vector<8x16xf32>
    %c0_5 = arith.constant 0 : index
    %c0_6 = arith.constant 0 : index
    %14 = vector.load %arg3[%c0_5, %c0_6] : memref<40x16xf32, #tpu.memory_space<vmem>>, vector<40x16xf32>
    %cst_7 = arith.constant dense<0.000000e+00> : vector<8x16xf32>
    %15 = tpu.matmul %11, %14, %cst_7 {dimension_numbers = #tpu.dot_dimension_numbers<[1], [0], [0], [1], [0, 0, 1, 1], [], []>} : vector<8x40xf32>, vector<40x16xf32>, vector<8x16xf32> -> vector<8x16xf32>
    %c0_8 = arith.constant 0 : index
    %c0_9 = arith.constant 0 : index
    %16 = vector.load %arg4[%c0_8, %c0_9] : memref<16x128xf32, #tpu.memory_space<vmem>>, vector<16x128xf32>
    %cst_10 = arith.constant dense<0.000000e+00> : vector<8x128xf32>
    %17 = tpu.matmul %13, %16, %cst_10 {dimension_numbers = #tpu.dot_dimension_numbers<[1], [0], [0], [1], [0, 0, 1, 1], [], []>} : vector<8x16xf32>, vector<16x128xf32>, vector<8x128xf32> -> vector<8x128xf32>
    %c0_11 = arith.constant 0 : index
    %c0_12 = arith.constant 0 : index
    %18 = vector.load %arg5[%c0_11, %c0_12] : memref<16x128xf32, #tpu.memory_space<vmem>>, vector<16x128xf32>
    %cst_13 = arith.constant dense<0.000000e+00> : vector<8x128xf32>
    %19 = tpu.matmul %15, %18, %cst_13 {dimension_numbers = #tpu.dot_dimension_numbers<[1], [0], [0], [1], [0, 0, 1, 1], [], []>} : vector<8x16xf32>, vector<16x128xf32>, vector<8x128xf32> -> vector<8x128xf32>
    %20 = arith.addf %17, %19 : vector<8x128xf32>
    %c0_14 = arith.constant 0 : index
    %c0_15 = arith.constant 0 : index
    %21 = vector.load %arg6[%c0_14, %c0_15] : memref<1x128xf32, #tpu.memory_space<vmem>>, vector<1x128xf32>
    %22 = vector.broadcast %21 : vector<1x128xf32> to vector<8x128xf32>
    %23 = arith.addf %20, %22 : vector<8x128xf32>
    %c0_16 = arith.constant 0 : index
    %c0_17 = arith.constant 0 : index
    %24 = vector.load %arg7[%c0_16, %c0_17] : memref<1x128xf32, #tpu.memory_space<vmem>>, vector<1x128xf32>
    %c0_18 = arith.constant 0 : index
    %c0_19 = arith.constant 0 : index
    %25 = vector.load %arg8[%c0_18, %c0_19] : memref<1x128xf32, #tpu.memory_space<vmem>>, vector<1x128xf32>
    %cst_20 = arith.constant dense<0.000000e+00> : vector<128xf32>
    %26 = vector.multi_reduction <add>, %23, %cst_20 [0] : vector<8x128xf32> to vector<128xf32>
    %27 = vector.shape_cast %26 : vector<128xf32> to vector<1x128xf32>
    %cst_21 = arith.constant 8.000000e+00 : f32
    %28 = vector.broadcast %cst_21 : f32 to vector<1x128xf32>
    %29 = arith.divf %27, %28 : vector<1x128xf32>
    %30 = vector.broadcast %29 : vector<1x128xf32> to vector<8x128xf32>
    %31 = arith.subf %23, %30 : vector<8x128xf32>
    %32 = arith.mulf %31, %31 : vector<8x128xf32>
    %cst_22 = arith.constant dense<0.000000e+00> : vector<128xf32>
    %33 = vector.multi_reduction <add>, %32, %cst_22 [0] : vector<8x128xf32> to vector<128xf32>
    %34 = vector.shape_cast %33 : vector<128xf32> to vector<1x128xf32>
    %cst_23 = arith.constant 8.000000e+00 : f32
    %35 = vector.broadcast %cst_23 : f32 to vector<1x128xf32>
    %36 = arith.divf %34, %35 : vector<1x128xf32>
    %cst_24 = arith.constant 9.99999974E-6 : f32
    %37 = vector.broadcast %cst_24 : f32 to vector<1x128xf32>
    %38 = arith.addf %36, %37 : vector<1x128xf32>
    %39 = math.rsqrt %38 : vector<1x128xf32>
    %40 = vector.broadcast %39 : vector<1x128xf32> to vector<8x128xf32>
    %41 = arith.mulf %31, %40 : vector<8x128xf32>
    %42 = vector.broadcast %24 : vector<1x128xf32> to vector<8x128xf32>
    %43 = arith.mulf %41, %42 : vector<8x128xf32>
    %44 = vector.broadcast %25 : vector<1x128xf32> to vector<8x128xf32>
    %45 = arith.addf %43, %44 : vector<8x128xf32>
    %cst_25 = arith.constant 0.000000e+00 : f32
    %46 = vector.broadcast %cst_25 : f32 to vector<8x128xf32>
    %47 = arith.maximumf %45, %46 : vector<8x128xf32>
    %c0_26 = arith.constant 0 : index
    %c0_27 = arith.constant 0 : index
    %48 = vector.load %arg9[%c0_26, %c0_27] : memref<128x128xf32, #tpu.memory_space<vmem>>, vector<128x128xf32>
    %cst_28 = arith.constant dense<0.000000e+00> : vector<8x128xf32>
    %49 = tpu.matmul %47, %48, %cst_28 {dimension_numbers = #tpu.dot_dimension_numbers<[1], [0], [0], [1], [0, 0, 1, 1], [], []>} : vector<8x128xf32>, vector<128x128xf32>, vector<8x128xf32> -> vector<8x128xf32>
    %c0_29 = arith.constant 0 : index
    %c0_30 = arith.constant 0 : index
    %50 = vector.load %arg10[%c0_29, %c0_30] : memref<1x128xf32, #tpu.memory_space<vmem>>, vector<1x128xf32>
    %51 = vector.broadcast %50 : vector<1x128xf32> to vector<8x128xf32>
    %52 = arith.addf %49, %51 : vector<8x128xf32>
    %c0_31 = arith.constant 0 : index
    %c0_32 = arith.constant 0 : index
    %53 = vector.load %arg11[%c0_31, %c0_32] : memref<1x128xf32, #tpu.memory_space<vmem>>, vector<1x128xf32>
    %c0_33 = arith.constant 0 : index
    %c0_34 = arith.constant 0 : index
    %54 = vector.load %arg12[%c0_33, %c0_34] : memref<1x128xf32, #tpu.memory_space<vmem>>, vector<1x128xf32>
    %cst_35 = arith.constant dense<0.000000e+00> : vector<128xf32>
    %55 = vector.multi_reduction <add>, %52, %cst_35 [0] : vector<8x128xf32> to vector<128xf32>
    %56 = vector.shape_cast %55 : vector<128xf32> to vector<1x128xf32>
    %cst_36 = arith.constant 8.000000e+00 : f32
    %57 = vector.broadcast %cst_36 : f32 to vector<1x128xf32>
    %58 = arith.divf %56, %57 : vector<1x128xf32>
    %59 = vector.broadcast %58 : vector<1x128xf32> to vector<8x128xf32>
    %60 = arith.subf %52, %59 : vector<8x128xf32>
    %61 = arith.mulf %60, %60 : vector<8x128xf32>
    %cst_37 = arith.constant dense<0.000000e+00> : vector<128xf32>
    %62 = vector.multi_reduction <add>, %61, %cst_37 [0] : vector<8x128xf32> to vector<128xf32>
    %63 = vector.shape_cast %62 : vector<128xf32> to vector<1x128xf32>
    %cst_38 = arith.constant 8.000000e+00 : f32
    %64 = vector.broadcast %cst_38 : f32 to vector<1x128xf32>
    %65 = arith.divf %63, %64 : vector<1x128xf32>
    %cst_39 = arith.constant 9.99999974E-6 : f32
    %66 = vector.broadcast %cst_39 : f32 to vector<1x128xf32>
    %67 = arith.addf %65, %66 : vector<1x128xf32>
    %68 = math.rsqrt %67 : vector<1x128xf32>
    %69 = vector.broadcast %68 : vector<1x128xf32> to vector<8x128xf32>
    %70 = arith.mulf %60, %69 : vector<8x128xf32>
    %71 = vector.broadcast %53 : vector<1x128xf32> to vector<8x128xf32>
    %72 = arith.mulf %70, %71 : vector<8x128xf32>
    %73 = vector.broadcast %54 : vector<1x128xf32> to vector<8x128xf32>
    %74 = arith.addf %72, %73 : vector<8x128xf32>
    %cst_40 = arith.constant 0.000000e+00 : f32
    %75 = vector.broadcast %cst_40 : f32 to vector<8x128xf32>
    %76 = arith.maximumf %74, %75 : vector<8x128xf32>
    %c0_41 = arith.constant 0 : index
    %c0_42 = arith.constant 0 : index
    %77 = vector.load %arg13[%c0_41, %c0_42] : memref<128x128xf32, #tpu.memory_space<vmem>>, vector<128x128xf32>
    %cst_43 = arith.constant dense<0.000000e+00> : vector<8x128xf32>
    %78 = tpu.matmul %76, %77, %cst_43 {dimension_numbers = #tpu.dot_dimension_numbers<[1], [0], [0], [1], [0, 0, 1, 1], [], []>} : vector<8x128xf32>, vector<128x128xf32>, vector<8x128xf32> -> vector<8x128xf32>
    %c0_44 = arith.constant 0 : index
    %c0_45 = arith.constant 0 : index
    %79 = vector.load %arg14[%c0_44, %c0_45] : memref<1x128xf32, #tpu.memory_space<vmem>>, vector<1x128xf32>
    %80 = vector.broadcast %79 : vector<1x128xf32> to vector<8x128xf32>
    %81 = arith.addf %78, %80 : vector<8x128xf32>
    %c0_46 = arith.constant 0 : index
    %c0_47 = arith.constant 0 : index
    %82 = vector.load %arg15[%c0_46, %c0_47] : memref<1x128xf32, #tpu.memory_space<vmem>>, vector<1x128xf32>
    %c0_48 = arith.constant 0 : index
    %c0_49 = arith.constant 0 : index
    %83 = vector.load %arg16[%c0_48, %c0_49] : memref<1x128xf32, #tpu.memory_space<vmem>>, vector<1x128xf32>
    %cst_50 = arith.constant dense<0.000000e+00> : vector<128xf32>
    %84 = vector.multi_reduction <add>, %81, %cst_50 [0] : vector<8x128xf32> to vector<128xf32>
    %85 = vector.shape_cast %84 : vector<128xf32> to vector<1x128xf32>
    %cst_51 = arith.constant 8.000000e+00 : f32
    %86 = vector.broadcast %cst_51 : f32 to vector<1x128xf32>
    %87 = arith.divf %85, %86 : vector<1x128xf32>
    %88 = vector.broadcast %87 : vector<1x128xf32> to vector<8x128xf32>
    %89 = arith.subf %81, %88 : vector<8x128xf32>
    %90 = arith.mulf %89, %89 : vector<8x128xf32>
    %cst_52 = arith.constant dense<0.000000e+00> : vector<128xf32>
    %91 = vector.multi_reduction <add>, %90, %cst_52 [0] : vector<8x128xf32> to vector<128xf32>
    %92 = vector.shape_cast %91 : vector<128xf32> to vector<1x128xf32>
    %cst_53 = arith.constant 8.000000e+00 : f32
    %93 = vector.broadcast %cst_53 : f32 to vector<1x128xf32>
    %94 = arith.divf %92, %93 : vector<1x128xf32>
    %cst_54 = arith.constant 9.99999974E-6 : f32
    %95 = vector.broadcast %cst_54 : f32 to vector<1x128xf32>
    %96 = arith.addf %94, %95 : vector<1x128xf32>
    %97 = math.rsqrt %96 : vector<1x128xf32>
    %98 = vector.broadcast %97 : vector<1x128xf32> to vector<8x128xf32>
    %99 = arith.mulf %89, %98 : vector<8x128xf32>
    %100 = vector.broadcast %82 : vector<1x128xf32> to vector<8x128xf32>
    %101 = arith.mulf %99, %100 : vector<8x128xf32>
    %102 = vector.broadcast %83 : vector<1x128xf32> to vector<8x128xf32>
    %103 = arith.addf %101, %102 : vector<8x128xf32>
    %cst_55 = arith.constant 0.000000e+00 : f32
    %104 = vector.broadcast %cst_55 : f32 to vector<8x128xf32>
    %105 = arith.maximumf %103, %104 : vector<8x128xf32>
    %c0_56 = arith.constant 0 : index
    %c0_57 = arith.constant 0 : index
    %106 = vector.load %arg17[%c0_56, %c0_57] : memref<8x128xf32, #tpu.memory_space<vmem>>, vector<8x128xf32>
    tpu.vector_store %arg17[%c0_56, %c0_57], %105 {strides = array<i32>} : memref<8x128xf32, #tpu.memory_space<vmem>>, vector<8x128xf32>,
    return
  }
}

</mosaic_0001>

<llo_original>
// kernel: mlp_forward.1
$region0: #{mlp_forward.1}
  #allocation0 [shape = 'u32[]', space=smem, size = 0x4, offset = 0x4, fixed_abs, tag = 'smem constant byte address 0x4 - core index']
  #allocation1 [shape = 'u32[72,128]{1,0:T(1,128)}', space=vmem, size = 0x9000, scoped, tag = 'internal scratch']
  %s0 = inlined_call_operand.vmem [shape: s32[8,1], index: 0, kind: input, shape index: {}]
  %s1 = inlined_call_operand.vmem [shape: s32[8,1], index: 1, kind: input, shape index: {}]
  %s2 = inlined_call_operand.vmem [shape: f32[56,16], index: 2, kind: input, shape index: {}]
  %s3 = inlined_call_operand.vmem [shape: f32[40,16], index: 3, kind: input, shape index: {}]
  %s4 = inlined_call_operand.vmem [shape: f32[16,128], index: 4, kind: input, shape index: {}]
  %s5 = inlined_call_operand.vmem [shape: f32[16,128], index: 5, kind: input, shape index: {}]
  %s6 = inlined_call_operand.vmem [shape: f32[1,128], index: 6, kind: input, shape index: {}]
  %s7 = inlined_call_operand.vmem [shape: f32[1,128], index: 7, kind: input, shape index: {}]
  %s8 = inlined_call_operand.vmem [shape: f32[1,128], index: 8, kind: input, shape index: {}]
  %s9 = inlined_call_operand.hbm [shape: f32[128,128], index: 9, kind: input, shape index: {}]
  %s10 = inlined_call_operand.vmem [shape: f32[1,128], index: 10, kind: input, shape index: {}]
  %s11 = inlined_call_operand.vmem [shape: f32[1,128], index: 11, kind: input, shape index: {}]
  %s12 = inlined_call_operand.vmem [shape: f32[1,128], index: 12, kind: input, shape index: {}]
  %s13 = inlined_call_operand.hbm [shape: f32[128,128], index: 13, kind: input, shape index: {}]
  %s14 = inlined_call_operand.vmem [shape: f32[1,128], index: 14, kind: input, shape index: {}]
  %s15 = inlined_call_operand.vmem [shape: f32[1,128], index: 15, kind: input, shape index: {}]
  %s16 = inlined_call_operand.vmem [shape: f32[1,128], index: 16, kind: input, shape index: {}]
  %s17 = inlined_call_operand.hbm [shape: f32[8,128], index: 17, kind: output, shape index: {}]
  %s18 = sld [smem:[#allocation0]]
  $region86: #{mlp_forward.1} parent=0
    _
  %s20 = ssub.s32 1, %s18
  %s21 = scalar_select 0, %s20, %s18
  $region1: #{mlp_forward.1} parent=0
    #allocation2 [shape = 'u8[65536]{0}', space=vmem, size = 0x10000, scoped, tag = 'input window, operand 9, single buffered']
    #allocation3 [shape = 's32[1]{0}', space=sflag, size = 0x4, scoped, tag = 'scoped memory for mlp_forward.1']
    #allocation4 [shape = 's32[1]{0}', space=sflag, size = 0x4, scoped, tag = 'scoped memory for mlp_forward.1']
    #allocation5 [shape = 'u8[65536]{0}', space=vmem, size = 0x10000, scoped, tag = 'input window, operand 13, single buffered']
    #allocation6 [shape = 's32[1]{0}', space=sflag, size = 0x4, scoped, tag = 'scoped memory for mlp_forward.1']
    #allocation7 [shape = 'u8[4096]{0}', space=vmem, size = 0x1000, scoped, tag = 'output window, operand 0, single buffered']
    %22 = vsyncpa [#allocation3], 0
    %23 = vsyncpa [#allocation6], 0
    %24 = vsyncpa [#allocation4], 0
    // Predicated region
    $region2: #{mlp_forward.1} parent=1 // pred_check
      _
    $region3: #{mlp_forward.1} parent=1 // pred_check_branch
      %26 = sbr.rel (0) target = $region5
    $region4: #{mlp_forward.1} parent=1 // pred_region
      _
    $region5: #{mlp_forward.1} parent=1 // pred_fallthru
      _
    // Predicated region
    $region6: #{mlp_forward.1} parent=1 // pred_check
      _
    $region7: #{mlp_forward.1} parent=1 // pred_check_branch
      %28 = sbr.rel (0) target = $region9
    $region8: #{mlp_forward.1} parent=1 // pred_region
      _
    $region9: #{mlp_forward.1} parent=1 // pred_fallthru
      _
    // Predicated region
    $region10: #{mlp_forward.1} parent=1 // pred_check
      _
    $region11: #{mlp_forward.1} parent=1 // pred_check_branch
      %30 = sbr.rel (0) target = $region13
    $region12: #{mlp_forward.1} parent=1 // pred_region
      _
    $region13: #{mlp_forward.1} parent=1 // pred_fallthru
      _
    // Predicated region
    $region14: #{mlp_forward.1} parent=1 // pred_check
      _
    $region15: #{mlp_forward.1} parent=1 // pred_check_branch
      %32 = sbr.rel (0) target = $region17
    $region16: #{mlp_forward.1} parent=1 // pred_region
      _
    $region17: #{mlp_forward.1} parent=1 // pred_fallthru
      _
    // Predicated region
    $region18: #{mlp_forward.1} parent=1 // pred_check
      _
    $region19: #{mlp_forward.1} parent=1 // pred_check_branch
      %34 = sbr.rel (0) target = $region21
    $region20: #{mlp_forward.1} parent=1 // pred_region
      _
    $region21: #{mlp_forward.1} parent=1 // pred_fallthru
      _
    // Predicated region
    $region22: #{mlp_forward.1} parent=1 // pred_check
      _
    $region23: #{mlp_forward.1} parent=1 // pred_check_branch
      %36 = sbr.rel (0) target = $region25
    $region24: #{mlp_forward.1} parent=1 // pred_region
      _
    $region25: #{mlp_forward.1} parent=1 // pred_fallthru
      _
    // Predicated region
    $region26: #{mlp_forward.1} parent=1 // pred_check
      _
    $region27: #{mlp_forward.1} parent=1 // pred_check_branch
      %38 = sbr.rel (0) target = $region29
    $region28: #{mlp_forward.1} parent=1 // pred_region
      _
    $region29: #{mlp_forward.1} parent=1 // pred_fallthru
      _
    // Predicated region
    $region30: #{mlp_forward.1} parent=1 // pred_check
      _
    $region31: #{mlp_forward.1} parent=1 // pred_check_branch
      %40 = sbr.rel (0) target = $region33
    $region32: #{mlp_forward.1} parent=1 // pred_region
      _
    $region33: #{mlp_forward.1} parent=1 // pred_fallthru
      _
    // Predicated region
    $region34: #{mlp_forward.1} parent=1 // pred_check
      _
    $region35: #{mlp_forward.1} parent=1 // pred_check_branch
      %42 = sbr.rel (0) target = $region37
    $region36: #{mlp_forward.1} parent=1 // pred_region
      _
    $region37: #{mlp_forward.1} parent=1 // pred_fallthru
      _
    // Predicated region
    $region38: #{mlp_forward.1} parent=1 // pred_check
      _
    $region39: #{mlp_forward.1} parent=1 // pred_check_branch
      %44 = sbr.rel (0) target = $region41
    $region40: #{mlp_forward.1} parent=1 // pred_region
      %46 = vsyncadd [#allocation3], 0
      %s47 = sshll.u32 %s9, 4
      %s48 = int_to_ptr.hbm [resolvable:$true] %s47
      %s49 = sshll.u32 [#allocation2], 4
      %s50 = int_to_ptr.vmem [resolvable:$true] %s49
      %55 = dma.hbm_to_vmem [thread:$0]  %s48, 2048, %s50, [#allocation3], 128, 128, 8
    $region41: #{mlp_forward.1} parent=1 // pred_fallthru
      _
    // Predicated region
    $region42: #{mlp_forward.1} parent=1 // pred_check
      _
    $region43: #{mlp_forward.1} parent=1 // pred_check_branch
      %57 = sbr.rel (0) target = $region45
    $region44: #{mlp_forward.1} parent=1 // pred_region
      _
    $region45: #{mlp_forward.1} parent=1 // pred_fallthru
      _
    // Predicated region
    $region46: #{mlp_forward.1} parent=1 // pred_check
      _
    $region47: #{mlp_forward.1} parent=1 // pred_check_branch
      %59 = sbr.rel (0) target = $region49
    $region48: #{mlp_forward.1} parent=1 // pred_region
      _
    $region49: #{mlp_forward.1} parent=1 // pred_fallthru
      _
    // Predicated region
    $region50: #{mlp_forward.1} parent=1 // pred_check
      _
    $region51: #{mlp_forward.1} parent=1 // pred_check_branch
      %61 = sbr.rel (0) target = $region53
    $region52: #{mlp_forward.1} parent=1 // pred_region
      _
    $region53: #{mlp_forward.1} parent=1 // pred_fallthru
      _
    // Predicated region
    $region54: #{mlp_forward.1} parent=1 // pred_check
      _
    $region55: #{mlp_forward.1} parent=1 // pred_check_branch
      %63 = sbr.rel (0) target = $region57
    $region56: #{mlp_forward.1} parent=1 // pred_region
      %65 = vsyncadd [#allocation6], 0
      %s66 = sshll.u32 %s13, 4
      %s67 = int_to_ptr.hbm [resolvable:$true] %s66
      %s68 = sshll.u32 [#allocation5], 4
      %s69 = int_to_ptr.vmem [resolvable:$true] %s68
      %74 = dma.hbm_to_vmem [thread:$0]  %s67, 2048, %s69, [#allocation6], 128, 128, 8
    $region57: #{mlp_forward.1} parent=1 // pred_fallthru
      _
    // Predicated region
    $region58: #{mlp_forward.1} parent=1 // pred_check
      _
    $region59: #{mlp_forward.1} parent=1 // pred_check_branch
      %76 = sbr.rel (0) target = $region61
    $region60: #{mlp_forward.1} parent=1 // pred_region
      _
    $region61: #{mlp_forward.1} parent=1 // pred_fallthru
      _
    // Predicated region
    $region62: #{mlp_forward.1} parent=1 // pred_check
      _
    $region63: #{mlp_forward.1} parent=1 // pred_check_branch
      %78 = sbr.rel (0) target = $region65
    $region64: #{mlp_forward.1} parent=1 // pred_region
      _
    $region65: #{mlp_forward.1} parent=1 // pred_fallthru
      _
    // Predicated region
    $region66: #{mlp_forward.1} parent=1 // pred_check
      _
    $region67: #{mlp_forward.1} parent=1 // pred_check_branch
      %80 = sbr.rel (0) target = $region69
    $region68: #{mlp_forward.1} parent=1 // pred_region
      _
    $region69: #{mlp_forward.1} parent=1 // pred_fallthru
      _
    // Predicated region
    $region70: #{mlp_forward.1} parent=1 // pred_check
      _
    $region71: #{mlp_forward.1} parent=1 // pred_check_branch
      %82 = sbr.rel (0) target = $region73
    $region72: #{mlp_forward.1} parent=1 // pred_region
      %84 = dma.done [#allocation3], 2048
    $region73: #{mlp_forward.1} parent=1 // pred_fallthru
      _
    // Predicated region
    $region74: #{mlp_forward.1} parent=1 // pred_check
      _
    $region75: #{mlp_forward.1} parent=1 // pred_check_branch
      %86 = sbr.rel (0) target = $region77
    $region76: #{mlp_forward.1} parent=1 // pred_region
      %88 = dma.done [#allocation6], 2048
    $region77: #{mlp_forward.1} parent=1 // pred_fallthru
      _
    %v89 = vlaneseq
    %v90 = vand.u32 %v89, 127
    %v91 = vld [vmem:[%s0] sm:$0xff]
    %92 = vset.pattern.permute.xlu0 0
    %93 = vperm.xlu0 %92, %v91
    %v94 = vpop.permute.xlu0 %93
    %vm95 = vcmp.eq.s32.totalorder %v90, %v94
    %v96 = vsel %vm95, 1, 0
    %v97 = vcvt.s32.f32 %v96
    %v98 = vld [vmem:[%s1] sm:$0xff]
    %99 = vset.pattern.permute.xlu0 0
    %100 = vperm.xlu0 %99, %v98
    %v101 = vpop.permute.xlu0 %100
    %vm102 = vcmp.eq.s32.totalorder %v90, %v101
    %v103 = vsel %vm102, 1, 0
    %v104 = vcvt.s32.f32 %v103
    %v105 = vld [vmem:[%s2] sm:$0xff]
    %v106 = vld [vmem:[%s2 + $0x8] sm:$0xff]
    %v107 = vld [vmem:[%s2 + $0x10] sm:$0xff]
    %v108 = vld [vmem:[%s2 + $0x18] sm:$0xff]
    %v109 = vld [vmem:[%s2 + $0x20] sm:$0xff]
    %v110 = vld [vmem:[%s2 + $0x28] sm:$0xff]
    %v111 = vld [vmem:[%s2 + $0x30] sm:$0xff]
    %vm112 = vcmask 457728
    %v114 = vsel %vm112, %v97, 0
    %116 = vmatpush.msra.mxu0 0.0
    %117 = vmatpush.msra.mxu0 0.0
    %118 = vmatpush.msra.mxu0 0.0
    %119 = vmatpush.msra.mxu0 0.0
    %120 = vmatpush.msra.mxu0 0.0
    %121 = vmatpush.msra.mxu0 0.0
    %122 = vmatpush.msra.mxu0 0.0
    %123 = vmatpush.msra.mxu0 0.0
    %124 = vmatpush.msra.mxu0 0.0
    %125 = vmatpush.msra.mxu0 %v111
    %126 = vmatpush.msra.mxu0 %v110
    %127 = vmatpush.msra.mxu0 %v109
    %128 = vmatpush.msra.mxu0 %v108
    %129 = vmatpush.msra.mxu0 %v107
    %130 = vmatpush.msra.mxu0 %v106
    %131 = vmatpush.msra.mxu0 %v105
    %132 = vmatmul.f32.gmra.mxu0 %v114
    %v133 = vpop.f32.mrf.mxu0
    %v134 = vadd.f32 0.0, %v133
    %135 = vdwg.mxu0
    %v136 = vld [vmem:[%s3] sm:$0xff]
    %v137 = vld [vmem:[%s3 + $0x8] sm:$0xff]
    %v138 = vld [vmem:[%s3 + $0x10] sm:$0xff]
    %v139 = vld [vmem:[%s3 + $0x18] sm:$0xff]
    %v140 = vld [vmem:[%s3 + $0x20] sm:$0xff]
    %vm141 = vcmask 326656
    %v143 = vsel %vm141, %v104, 0
    %145 = vmatpush.msra.mxu0 0.0
    %146 = vmatpush.msra.mxu0 0.0
    %147 = vmatpush.msra.mxu0 0.0
    %148 = vmatpush.msra.mxu0 0.0
    %149 = vmatpush.msra.mxu0 0.0
    %150 = vmatpush.msra.mxu0 0.0
    %151 = vmatpush.msra.mxu0 0.0
    %152 = vmatpush.msra.mxu0 0.0
    %153 = vmatpush.msra.mxu0 0.0
    %154 = vmatpush.msra.mxu0 0.0
    %155 = vmatpush.msra.mxu0 0.0
    %156 = vmatpush.msra.mxu0 %v140
    %157 = vmatpush.msra.mxu0 %v139
    %158 = vmatpush.msra.mxu0 %v138
    %159 = vmatpush.msra.mxu0 %v137
    %160 = vmatpush.msra.mxu0 %v136
    %161 = vmatmul.f32.gmra.mxu0 %v143
    %v162 = vpop.f32.mrf.mxu0
    %v163 = vadd.f32 0.0, %v162
    %164 = vdwg.mxu0
    %v165 = vld [vmem:[%s4] sm:$0xff]
    %v166 = vld [vmem:[%s4 + $0x8] sm:$0xff]
    %v167 = vld [vmem:[%s5] sm:$0xff]
    %v168 = vld [vmem:[%s5 + $0x8] sm:$0xff]
    %vm169 = vcmask 130048
    %v171 = vsel %vm169, %v163, 0
    %173 = vmatpush.msra.mxu0 0.0
    %174 = vmatpush.msra.mxu0 0.0
    %175 = vmatpush.msra.mxu0 0.0
    %176 = vmatpush.msra.mxu0 0.0
    %177 = vmatpush.msra.mxu0 0.0
    %178 = vmatpush.msra.mxu0 0.0
    %179 = vmatpush.msra.mxu0 0.0
    %180 = vmatpush.msra.mxu0 0.0
    %181 = vmatpush.msra.mxu0 0.0
    %182 = vmatpush.msra.mxu0 0.0
    %183 = vmatpush.msra.mxu0 0.0
    %184 = vmatpush.msra.mxu0 0.0
    %185 = vmatpush.msra.mxu0 0.0
    %186 = vmatpush.msra.mxu0 0.0
    %187 = vmatpush.msra.mxu0 %v168
    %188 = vmatpush.msra.mxu0 %v167
    %189 = vmatmul.f32.gmra.mxu0 %v171
    %v190 = vpop.f32.mrf.mxu0
    %v191 = vadd.f32 0.0, %v190
    %192 = vdwg.mxu0
    %v194 = vsel %vm169, %v134, 0
    %196 = vmatpush.msra.mxu0 0.0
    %197 = vmatpush.msra.mxu0 0.0
    %198 = vmatpush.msra.mxu0 0.0
    %199 = vmatpush.msra.mxu0 0.0
    %200 = vmatpush.msra.mxu0 0.0
    %201 = vmatpush.msra.mxu0 0.0
    %202 = vmatpush.msra.mxu0 0.0
    %203 = vmatpush.msra.mxu0 0.0
    %204 = vmatpush.msra.mxu0 0.0
    %205 = vmatpush.msra.mxu0 0.0
    %206 = vmatpush.msra.mxu0 0.0
    %207 = vmatpush.msra.mxu0 0.0
    %208 = vmatpush.msra.mxu0 0.0
    %209 = vmatpush.msra.mxu0 0.0
    %210 = vmatpush.msra.mxu0 %v166
    %211 = vmatpush.msra.mxu0 %v165
    %212 = vmatmul.f32.gmra.mxu0 %v194
    %v213 = vpop.f32.mrf.mxu0
    %v214 = vadd.f32 %v191, %v213
    %215 = vdwg.mxu0
    %v216 = vld [vmem:[%s6] sm:$0x1]
    %v218 = vperm.slane %v216, 0
    %v220 = vadd.f32 %v214, %v218
    %v221 = vld [vmem:[%s7] sm:$0x1]
    %v222 = vld [vmem:[%s8] sm:$0x1]
    %v223 = vrot.slane %v220, 4
    %v224 = vadd.f32 %v220, %v223
    %v225 = vrot.slane %v224, 2
    %v226 = vadd.f32 %v224, %v225
    %v227 = vrot.slane %v226, 1
    %v228 = vadd.f32 %v226, %v227
    %v229 = vrcp.pop 8.0
    %v230 = vmul.f32 8.0, %v229
    %v231 = vsub.f32 1.0, %v230
    %v232 = vmul.f32 %v229, %v231
    %v233 = vadd.f32 %v229, %v232
    %vm234 = vweird.f32 %v229
    %v235 = vsel %vm234, %v229, %v233
    %v236 = vmul.f32 %v228, %v235
    %v237 = vsub.f32 %v220, %v236
    %v238 = vmul.f32 %v237, %v237
    %v239 = vrot.slane %v238, 4
    %v240 = vadd.f32 %v238, %v239
    %v241 = vrot.slane %v240, 2
    %v242 = vadd.f32 %v240, %v241
    %v243 = vrot.slane %v242, 1
    %v244 = vadd.f32 %v242, %v243
    %v245 = vmul.f32 %v244, %v235
    %v246 = vadd.f32 %v245, 1e-05
    %v247 = vrsqrt.pop %v246
    %v248 = vmul.f32 %v247, %v246
    %v249 = vmul.f32 %v248, %v247
    %v250 = vmul.f32 0.5, %v249
    %v251 = vsub.f32 1.5, %v250
    %v252 = vmul.f32 %v247, %v251
    %vm253 = vweird.f32 %v246
    %vm254 = vweird.f32 %v247
    %vm255 = vmor %vm253, %vm254
    %v256 = vsel %vm255, %v247, %v252
    %v257 = vmul.f32 %v237, %v256
    %v259 = vperm.slane %v221, 0
    %v261 = vmul.f32 %v257, %v259
    %v263 = vperm.slane %v222, 0
    %v265 = vadd.f32 %v261, %v263
    %v266 = vmax.f32 %v265, 0.0
    %v267 = vld [vmem:[#allocation2] sm:$0xff]
    %v268 = vld [vmem:[#allocation2 + $0x8] sm:$0xff]
    %v269 = vld [vmem:[#allocation2 + $0x10] sm:$0xff]
    %v270 = vld [vmem:[#allocation2 + $0x18] sm:$0xff]
    %v271 = vld [vmem:[#allocation2 + $0x20] sm:$0xff]
    %v272 = vld [vmem:[#allocation2 + $0x28] sm:$0xff]
    %v273 = vld [vmem:[#allocation2 + $0x30] sm:$0xff]
    %v274 = vld [vmem:[#allocation2 + $0x38] sm:$0xff]
    %v275 = vld [vmem:[#allocation2 + $0x40] sm:$0xff]
    %v276 = vld [vmem:[#allocation2 + $0x48] sm:$0xff]
    %v277 = vld [vmem:[#allocation2 + $0x50] sm:$0xff]
    %v278 = vld [vmem:[#allocation2 + $0x58] sm:$0xff]
    %v279 = vld [vmem:[#allocation2 + $0x60] sm:$0xff]
    %v280 = vld [vmem:[#allocation2 + $0x68] sm:$0xff]
    %v281 = vld [vmem:[#allocation2 + $0x70] sm:$0xff]
    %v282 = vld [vmem:[#allocation2 + $0x78] sm:$0xff]
    %v283 = vld [vmem:[%s10] sm:$0x1]
    %v285 = vperm.slane %v283, 0
    %287 = vmatpush.msra.mxu0 %v282
    %288 = vmatpush.msra.mxu0 %v281
    %289 = vmatpush.msra.mxu0 %v280
    %290 = vmatpush.msra.mxu0 %v279
    %291 = vmatpush.msra.mxu0 %v278
    %292 = vmatpush.msra.mxu0 %v277
    %293 = vmatpush.msra.mxu0 %v276
    %294 = vmatpush.msra.mxu0 %v275
    %295 = vmatpush.msra.mxu0 %v274
    %296 = vmatpush.msra.mxu0 %v273
    %297 = vmatpush.msra.mxu0 %v272
    %298 = vmatpush.msra.mxu0 %v271
    %299 = vmatpush.msra.mxu0 %v270
    %300 = vmatpush.msra.mxu0 %v269
    %301 = vmatpush.msra.mxu0 %v268
    %302 = vmatpush.msra.mxu0 %v267
    %303 = vmatmul.f32.gmra.mxu0 %v266
    %v304 = vpop.f32.mrf.mxu0
    %v305 = vadd.f32 %v285, %v304
    %306 = vdwg.mxu0
    %v307 = vld [vmem:[%s11] sm:$0x1]
    %v308 = vld [vmem:[%s12] sm:$0x1]
    %v309 = vrot.slane %v305, 4
    %v310 = vadd.f32 %v305, %v309
    %v311 = vrot.slane %v310, 2
    %v312 = vadd.f32 %v310, %v311
    %v313 = vrot.slane %v312, 1
    %v314 = vadd.f32 %v312, %v313
    %v315 = vmul.f32 %v314, %v235
    %v316 = vsub.f32 %v305, %v315
    %v317 = vmul.f32 %v316, %v316
    %v318 = vrot.slane %v317, 4
    %v319 = vadd.f32 %v317, %v318
    %v320 = vrot.slane %v319, 2
    %v321 = vadd.f32 %v319, %v320
    %v322 = vrot.slane %v321, 1
    %v323 = vadd.f32 %v321, %v322
    %v324 = vmul.f32 %v323, %v235
    %v325 = vadd.f32 %v324, 1e-05
    %v326 = vrsqrt.pop %v325
    %v327 = vmul.f32 %v326, %v325
    %v328 = vmul.f32 %v327, %v326
    %v329 = vmul.f32 0.5, %v328
    %v330 = vsub.f32 1.5, %v329
    %v331 = vmul.f32 %v326, %v330
    %vm332 = vweird.f32 %v325
    %vm333 = vweird.f32 %v326
    %vm334 = vmor %vm332, %vm333
    %v335 = vsel %vm334, %v326, %v331
    %v336 = vmul.f32 %v316, %v335
    %v338 = vperm.slane %v307, 0
    %v340 = vmul.f32 %v336, %v338
    %v342 = vperm.slane %v308, 0
    %v344 = vadd.f32 %v340, %v342
    %v345 = vmax.f32 %v344, 0.0
    %v346 = vld [vmem:[#allocation5] sm:$0xff]
    %v347 = vld [vmem:[#allocation5 + $0x8] sm:$0xff]
    %v348 = vld [vmem:[#allocation5 + $0x10] sm:$0xff]
    %v349 = vld [vmem:[#allocation5 + $0x18] sm:$0xff]
    %v350 = vld [vmem:[#allocation5 + $0x20] sm:$0xff]
    %v351 = vld [vmem:[#allocation5 + $0x28] sm:$0xff]
    %v352 = vld [vmem:[#allocation5 + $0x30] sm:$0xff]
    %v353 = vld [vmem:[#allocation5 + $0x38] sm:$0xff]
    %v354 = vld [vmem:[#allocation5 + $0x40] sm:$0xff]
    %v355 = vld [vmem:[#allocation5 + $0x48] sm:$0xff]
    %v356 = vld [vmem:[#allocation5 + $0x50] sm:$0xff]
    %v357 = vld [vmem:[#allocation5 + $0x58] sm:$0xff]
    %v358 = vld [vmem:[#allocation5 + $0x60] sm:$0xff]
    %v359 = vld [vmem:[#allocation5 + $0x68] sm:$0xff]
    %v360 = vld [vmem:[#allocation5 + $0x70] sm:$0xff]
    %v361 = vld [vmem:[#allocation5 + $0x78] sm:$0xff]
    %v362 = vld [vmem:[%s14] sm:$0x1]
    %v364 = vperm.slane %v362, 0
    %366 = vmatpush.msra.mxu0 %v361
    %367 = vmatpush.msra.mxu0 %v360
    %368 = vmatpush.msra.mxu0 %v359
    %369 = vmatpush.msra.mxu0 %v358
    %370 = vmatpush.msra.mxu0 %v357
    %371 = vmatpush.msra.mxu0 %v356
    %372 = vmatpush.msra.mxu0 %v355
    %373 = vmatpush.msra.mxu0 %v354
    %374 = vmatpush.msra.mxu0 %v353
    %375 = vmatpush.msra.mxu0 %v352
    %376 = vmatpush.msra.mxu0 %v351
    %377 = vmatpush.msra.mxu0 %v350
    %378 = vmatpush.msra.mxu0 %v349
    %379 = vmatpush.msra.mxu0 %v348
    %380 = vmatpush.msra.mxu0 %v347
    %381 = vmatpush.msra.mxu0 %v346
    %382 = vmatmul.f32.gmra.mxu0 %v345
    %v383 = vpop.f32.mrf.mxu0
    %v384 = vadd.f32 %v364, %v383
    %385 = vdwg.mxu0
    %v386 = vld [vmem:[%s15] sm:$0x1]
    %v387 = vld [vmem:[%s16] sm:$0x1]
    %v388 = vrot.slane %v384, 4
    %v389 = vadd.f32 %v384, %v388
    %v390 = vrot.slane %v389, 2
    %v391 = vadd.f32 %v389, %v390
    %v392 = vrot.slane %v391, 1
    %v393 = vadd.f32 %v391, %v392
    %v394 = vmul.f32 %v393, %v235
    %v395 = vsub.f32 %v384, %v394
    %v396 = vmul.f32 %v395, %v395
    %v397 = vrot.slane %v396, 4
    %v398 = vadd.f32 %v396, %v397
    %v399 = vrot.slane %v398, 2
    %v400 = vadd.f32 %v398, %v399
    %v401 = vrot.slane %v400, 1
    %v402 = vadd.f32 %v400, %v401
    %v403 = vmul.f32 %v402, %v235
    %v404 = vadd.f32 %v403, 1e-05
    %v405 = vrsqrt.pop %v404
    %v406 = vmul.f32 %v405, %v404
    %v407 = vmul.f32 %v406, %v405
    %v408 = vmul.f32 0.5, %v407
    %v409 = vsub.f32 1.5, %v408
    %v410 = vmul.f32 %v405, %v409
    %vm411 = vweird.f32 %v404
    %vm412 = vweird.f32 %v405
    %vm413 = vmor %vm411, %vm412
    %v414 = vsel %vm413, %v405, %v410
    %v415 = vmul.f32 %v395, %v414
    %v417 = vperm.slane %v386, 0
    %v419 = vmul.f32 %v415, %v417
    %v421 = vperm.slane %v387, 0
    %v423 = vadd.f32 %v419, %v421
    %v424 = vmax.f32 %v423, 0.0
    %425 = vst [vmem:[#allocation7] sm:$0xff] %v424
    // Predicated region
    $region78: #{mlp_forward.1} parent=1 // pred_check
      _
    $region79: #{mlp_forward.1} parent=1 // pred_check_branch
      %427 = sbr.rel (0) target = $region81
    $region80: #{mlp_forward.1} parent=1 // pred_region
      %429 = vsyncadd [#allocation4], 0
      %s431 = sshll.u32 [#allocation7], 4
      %s432 = int_to_ptr.vmem [resolvable:$true] %s431
      %s433 = sshll.u32 %s17, 4
      %s434 = int_to_ptr.hbm [resolvable:$true] %s433
      %436 = dma.vmem_to_hbm [thread:$0]  %s432, 128, %s434, [#allocation4]
    $region81: #{mlp_forward.1} parent=1 // pred_fallthru
      _
    // Predicated region
    $region82: #{mlp_forward.1} parent=1 // pred_check
      _
    $region83: #{mlp_forward.1} parent=1 // pred_check_branch
      %438 = sbr.rel (0) target = $region85
    $region84: #{mlp_forward.1} parent=1 // pred_region
      %440 = dma.done [#allocation4], 128
    $region85: #{mlp_forward.1} parent=1 // pred_fallthru
      _
    %441 = vsyncpa [#allocation3], 1
    %442 = vsyncpa [#allocation6], 1
    %443 = vsyncpa [#allocation4], 1

</llo_original>
